<compile_context>
chip_gen: v7x
topology: tpu7x:2x2x1
jax: 0.10.0
libtpu: 0.0.40
codegen_flags: <defaults>
</compile_context>

<pallas_src>
import functools

import jax
import jax.numpy as jnp
import numpy as np
from jax.experimental import pallas as pl
from jax.experimental.pallas import tpu as pltpu


def rnn_kernel(emb_ref,    # (T*B, E) bf16, time-major flattened embeddings
               wih_ref,    # (E, H)   bf16
               bias_ref,   # (1, H)   f32   (bih + bhh, pre-folded)
               whh_ref,    # (H, H)   bf16
               wout_ref,   # (H, Vp)  bf16  (Vp = round_up(V, 128))
               bout_ref,   # (1, Vp)  f32
               out_ref,    # (B, Vp)  f32
               *, B, T, H):
    # ---- hoisted, time-invariant input projection -------------------------
    # One big (T*B, E) @ (E, H) bf16 matmul with f32 accumulation; the folded
    # bias is added once here so the recurrence has no per-step broadcasts.
    xproj = (jnp.dot(emb_ref[...], wih_ref[...],
                     preferred_element_type=jnp.float32)
             + bias_ref[...])                                   # (T*B, H) f32

    whh = whh_ref[...]                                          # bf16, hoisted

    # ---- serial recurrence (fully unrolled, static slices) -----------------
    # xproj stays in vregs (8 vregs at these sizes); h stays f32, only the
    # matmul operand is cast to bf16.
    h = jnp.zeros((B, H), jnp.float32)
    for t in range(T):
        xp = xproj[t * B:(t + 1) * B, :]                        # (B, H) f32
        hh = jnp.dot(h.astype(jnp.bfloat16), whh,
                     preferred_element_type=jnp.float32)
        h = jnp.maximum(xp + hh, 0.0)                           # ReLU, f32
    # TODO(synk): on v5e/v6e drive the MXU explicitly (matmul_push_rhs(whh)
    # once + matmul_acc_lhs per step) if the bundle dump shows T RHS pushes.

    # ---- output projection (lane-dense Vp store) ---------------------------
    out_ref[...] = (jnp.dot(h.astype(jnp.bfloat16), wout_ref[...],
                            preferred_element_type=jnp.float32)
                    + bout_ref[...]).astype(out_ref.dtype)


def prepare_params(params):
    """One-time, out-of-the-forward-path weight prep.

    bf16 casts for all matmul operands, bias fold (bih + bhh), lane padding
    of the output projection to a multiple of 128.
    """
    V = params["wout"].shape[1]
    Vp = ((V + 127) // 128) * 128
    return {
        "emb": params["embedding"].astype(jnp.bfloat16),
        "wih": params["wih"].astype(jnp.bfloat16),
        "bias": (params["bih"] + params["bhh"]).astype(jnp.float32),
        "whh": params["whh"].astype(jnp.bfloat16),
        "wout": jnp.pad(params["wout"],
                        ((0, 0), (0, Vp - V))).astype(jnp.bfloat16),
        "bout": jnp.pad(params["bout"],
                        ((0, 0), (0, Vp - V))).astype(jnp.float32),
        "V": V,
        "Vp": Vp,
    }


def basic_rnn_forward(x_tokens, prep):
    """x_tokens: int32 [B, T]. Returns logits [B, V] (PyTorch BasicRNN semantics)."""
    B, T = x_tokens.shape
    H = prep["whh"].shape[0]
    Vp = prep["wout"].shape[1]
    V = prep["V"]

    # Glue (plain JAX): embedding gather + time-major flatten, gathered in bf16.
    # TODO(synk): fuse the gather into the kernel (scalar-prefetch ids +
    # make_async_copy row gather) once T*E is large enough for the extra HBM
    # round trip to matter.
    ids_tm = jnp.transpose(x_tokens, (1, 0)).reshape(-1)        # (T*B,)
    emb_flat = prep["emb"][ids_tm]                              # (T*B, E) bf16

    kernel = functools.partial(rnn_kernel, B=B, T=T, H=H)
    vmem = pl.BlockSpec(memory_space=pltpu.MemorySpace.VMEM)

    out_p = pl.pallas_call(
        kernel,
        out_shape=jax.ShapeDtypeStruct((B, Vp), jnp.float32),
        in_specs=[vmem] * 6,
        out_specs=vmem,
    )(emb_flat, prep["wih"], prep["bias"], prep["whh"],
      prep["wout"], prep["bout"])

    return out_p[:, :V]


def init_params(key, vocab_size, embedding_dim, hidden_size, output_size):
    """Deterministic init mirroring nn.Embedding / nn.Linear shapes.

    Each torch Linear(in, out) weight (out, in) is kept transposed as
    (in, out) so the kernel computes x @ W + b directly.
    """
    keys = jax.random.split(key, 8)

    def linear(kw, kb, in_dim, out_dim):
        bound = 1.0 / np.sqrt(in_dim)
        w = jax.random.uniform(kw, (in_dim, out_dim), jnp.float32, -bound, bound)
        b = jax.random.uniform(kb, (1, out_dim), jnp.float32, -bound, bound)
        return w, b

    params = {}
    params["embedding"] = jax.random.normal(
        keys[0], (vocab_size, embedding_dim), jnp.float32)
    params["wih"], params["bih"] = linear(keys[1], keys[2],
                                          embedding_dim, hidden_size)
    params["whh"], params["bhh"] = linear(keys[3], keys[4],
                                          hidden_size, hidden_size)
    params["wout"], params["bout"] = linear(keys[5], keys[6],
                                            hidden_size, output_size)
    return params


def reference_forward(x_tokens, params):
    """Pure-JAX f32 reference mirroring the PyTorch BasicRNN loop."""
    B, T = x_tokens.shape
    H = params["whh"].shape[0]
    h = jnp.zeros((B, H), jnp.float32)
    for t in range(T):
        emb = params["embedding"][x_tokens[:, t]]
        h = jnp.maximum(emb @ params["wih"] + params["bih"]
                        + h @ params["whh"] + params["bhh"], 0.0)
    return h @ params["wout"] + params["bout"]


if __name__ == "__main__":
    vocab_size = 77          # non-multiple of 128 to exercise output padding
    embedding_dim = 128
    hidden_size = 128
    output_size = vocab_size
    B, T = 8, 8

    key = jax.random.PRNGKey(0)
    k_params, k_x = jax.random.split(key)
    params = init_params(k_params, vocab_size, embedding_dim,
                         hidden_size, output_size)
    prep = prepare_params(params)
    x = jax.random.randint(k_x, (B, T), 0, vocab_size, dtype=jnp.int32)

    out = basic_rnn_forward(x, prep)
    out = jax.block_until_ready(out)

    ref = reference_forward(x, params)
    # bf16 matmul operands => loosened parity tolerance vs. the f32 reference.
    np.testing.assert_allclose(np.asarray(out), np.asarray(ref),
                               rtol=5e-2, atol=5e-2)
    print("KERNEL_OK")
</pallas_src>

<mosaic_0001>
module attributes {stable_mosaic.version = 11 : i64} {
  func.func @rnn_kernel(%arg0: memref<64x128xbf16, #tpu.memory_space<vmem>>, %arg1: memref<128x128xbf16, #tpu.memory_space<vmem>>, %arg2: memref<1x128xf32, #tpu.memory_space<vmem>>, %arg3: memref<128x128xbf16, #tpu.memory_space<vmem>>, %arg4: memref<128x128xbf16, #tpu.memory_space<vmem>>, %arg5: memref<1x128xf32, #tpu.memory_space<vmem>>, %arg6: memref<8x128xf32, #tpu.memory_space<vmem>>) attributes {dimension_semantics = [], scalar_prefetch = 0 : i64, scratch_operands = 0 : i64, tpu.core_type = #tpu.core_type<tc>} {
    %c0 = arith.constant 0 : index
    %c0_0 = arith.constant 0 : index
    %0 = vector.load %arg0[%c0, %c0_0] : memref<64x128xbf16, #tpu.memory_space<vmem>>, vector<64x128xbf16>
    %c0_1 = arith.constant 0 : index
    %c0_2 = arith.constant 0 : index
    %1 = vector.load %arg1[%c0_1, %c0_2] : memref<128x128xbf16, #tpu.memory_space<vmem>>, vector<128x128xbf16>
    %cst = arith.constant dense<0.000000e+00> : vector<64x128xf32>
    %2 = tpu.matmul %0, %1, %cst {dimension_numbers = #tpu.dot_dimension_numbers<[1], [0], [0], [1], [0, 0, 1, 1], [], []>} : vector<64x128xbf16>, vector<128x128xbf16>, vector<64x128xf32> -> vector<64x128xf32>
    %c0_3 = arith.constant 0 : index
    %c0_4 = arith.constant 0 : index
    %3 = vector.load %arg2[%c0_3, %c0_4] : memref<1x128xf32, #tpu.memory_space<vmem>>, vector<1x128xf32>
    %4 = vector.broadcast %3 : vector<1x128xf32> to vector<64x128xf32>
    %5 = arith.addf %2, %4 : vector<64x128xf32>
    %c0_5 = arith.constant 0 : index
    %c0_6 = arith.constant 0 : index
    %6 = vector.load %arg3[%c0_5, %c0_6] : memref<128x128xbf16, #tpu.memory_space<vmem>>, vector<128x128xbf16>
    %cst_7 = arith.constant 0.000000e+00 : f32
    %7 = vector.broadcast %cst_7 : f32 to vector<8x128xf32>
    %8 = vector.extract_strided_slice %5 {offsets = [0, 0], sizes = [8, 128], strides = [1, 1]} : vector<64x128xf32> to vector<8x128xf32>
    %9 = arith.truncf %7 : vector<8x128xf32> to vector<8x128xbf16>
    %cst_8 = arith.constant dense<0.000000e+00> : vector<8x128xf32>
    %10 = tpu.matmul %9, %6, %cst_8 {dimension_numbers = #tpu.dot_dimension_numbers<[1], [0], [0], [1], [0, 0, 1, 1], [], []>} : vector<8x128xbf16>, vector<128x128xbf16>, vector<8x128xf32> -> vector<8x128xf32>
    %11 = arith.addf %8, %10 : vector<8x128xf32>
    %cst_9 = arith.constant 0.000000e+00 : f32
    %12 = vector.broadcast %cst_9 : f32 to vector<8x128xf32>
    %13 = arith.maximumf %11, %12 : vector<8x128xf32>
    %14 = vector.extract_strided_slice %5 {offsets = [8, 0], sizes = [8, 128], strides = [1, 1]} : vector<64x128xf32> to vector<8x128xf32>
    %15 = arith.truncf %13 : vector<8x128xf32> to vector<8x128xbf16>
    %cst_10 = arith.constant dense<0.000000e+00> : vector<8x128xf32>
    %16 = tpu.matmul %15, %6, %cst_10 {dimension_numbers = #tpu.dot_dimension_numbers<[1], [0], [0], [1], [0, 0, 1, 1], [], []>} : vector<8x128xbf16>, vector<128x128xbf16>, vector<8x128xf32> -> vector<8x128xf32>
    %17 = arith.addf %14, %16 : vector<8x128xf32>
    %cst_11 = arith.constant 0.000000e+00 : f32
    %18 = vector.broadcast %cst_11 : f32 to vector<8x128xf32>
    %19 = arith.maximumf %17, %18 : vector<8x128xf32>
    %20 = vector.extract_strided_slice %5 {offsets = [16, 0], sizes = [8, 128], strides = [1, 1]} : vector<64x128xf32> to vector<8x128xf32>
    %21 = arith.truncf %19 : vector<8x128xf32> to vector<8x128xbf16>
    %cst_12 = arith.constant dense<0.000000e+00> : vector<8x128xf32>
    %22 = tpu.matmul %21, %6, %cst_12 {dimension_numbers = #tpu.dot_dimension_numbers<[1], [0], [0], [1], [0, 0, 1, 1], [], []>} : vector<8x128xbf16>, vector<128x128xbf16>, vector<8x128xf32> -> vector<8x128xf32>
    %23 = arith.addf %20, %22 : vector<8x128xf32>
    %cst_13 = arith.constant 0.000000e+00 : f32
    %24 = vector.broadcast %cst_13 : f32 to vector<8x128xf32>
    %25 = arith.maximumf %23, %24 : vector<8x128xf32>
    %26 = vector.extract_strided_slice %5 {offsets = [24, 0], sizes = [8, 128], strides = [1, 1]} : vector<64x128xf32> to vector<8x128xf32>
    %27 = arith.truncf %25 : vector<8x128xf32> to vector<8x128xbf16>
    %cst_14 = arith.constant dense<0.000000e+00> : vector<8x128xf32>
    %28 = tpu.matmul %27, %6, %cst_14 {dimension_numbers = #tpu.dot_dimension_numbers<[1], [0], [0], [1], [0, 0, 1, 1], [], []>} : vector<8x128xbf16>, vector<128x128xbf16>, vector<8x128xf32> -> vector<8x128xf32>
    %29 = arith.addf %26, %28 : vector<8x128xf32>
    %cst_15 = arith.constant 0.000000e+00 : f32
    %30 = vector.broadcast %cst_15 : f32 to vector<8x128xf32>
    %31 = arith.maximumf %29, %30 : vector<8x128xf32>
    %32 = vector.extract_strided_slice %5 {offsets = [32, 0], sizes = [8, 128], strides = [1, 1]} : vector<64x128xf32> to vector<8x128xf32>
    %33 = arith.truncf %31 : vector<8x128xf32> to vector<8x128xbf16>
    %cst_16 = arith.constant dense<0.000000e+00> : vector<8x128xf32>
    %34 = tpu.matmul %33, %6, %cst_16 {dimension_numbers = #tpu.dot_dimension_numbers<[1], [0], [0], [1], [0, 0, 1, 1], [], []>} : vector<8x128xbf16>, vector<128x128xbf16>, vector<8x128xf32> -> vector<8x128xf32>
    %35 = arith.addf %32, %34 : vector<8x128xf32>
    %cst_17 = arith.constant 0.000000e+00 : f32
    %36 = vector.broadcast %cst_17 : f32 to vector<8x128xf32>
    %37 = arith.maximumf %35, %36 : vector<8x128xf32>
    %38 = vector.extract_strided_slice %5 {offsets = [40, 0], sizes = [8, 128], strides = [1, 1]} : vector<64x128xf32> to vector<8x128xf32>
    %39 = arith.truncf %37 : vector<8x128xf32> to vector<8x128xbf16>
    %cst_18 = arith.constant dense<0.000000e+00> : vector<8x128xf32>
    %40 = tpu.matmul %39, %6, %cst_18 {dimension_numbers = #tpu.dot_dimension_numbers<[1], [0], [0], [1], [0, 0, 1, 1], [], []>} : vector<8x128xbf16>, vector<128x128xbf16>, vector<8x128xf32> -> vector<8x128xf32>
    %41 = arith.addf %38, %40 : vector<8x128xf32>
    %cst_19 = arith.constant 0.000000e+00 : f32
    %42 = vector.broadcast %cst_19 : f32 to vector<8x128xf32>
    %43 = arith.maximumf %41, %42 : vector<8x128xf32>
    %44 = vector.extract_strided_slice %5 {offsets = [48, 0], sizes = [8, 128], strides = [1, 1]} : vector<64x128xf32> to vector<8x128xf32>
    %45 = arith.truncf %43 : vector<8x128xf32> to vector<8x128xbf16>
    %cst_20 = arith.constant dense<0.000000e+00> : vector<8x128xf32>
    %46 = tpu.matmul %45, %6, %cst_20 {dimension_numbers = #tpu.dot_dimension_numbers<[1], [0], [0], [1], [0, 0, 1, 1], [], []>} : vector<8x128xbf16>, vector<128x128xbf16>, vector<8x128xf32> -> vector<8x128xf32>
    %47 = arith.addf %44, %46 : vector<8x128xf32>
    %cst_21 = arith.constant 0.000000e+00 : f32
    %48 = vector.broadcast %cst_21 : f32 to vector<8x128xf32>
    %49 = arith.maximumf %47, %48 : vector<8x128xf32>
    %50 = vector.extract_strided_slice %5 {offsets = [56, 0], sizes = [8, 128], strides = [1, 1]} : vector<64x128xf32> to vector<8x128xf32>
    %51 = arith.truncf %49 : vector<8x128xf32> to vector<8x128xbf16>
    %cst_22 = arith.constant dense<0.000000e+00> : vector<8x128xf32>
    %52 = tpu.matmul %51, %6, %cst_22 {dimension_numbers = #tpu.dot_dimension_numbers<[1], [0], [0], [1], [0, 0, 1, 1], [], []>} : vector<8x128xbf16>, vector<128x128xbf16>, vector<8x128xf32> -> vector<8x128xf32>
    %53 = arith.addf %50, %52 : vector<8x128xf32>
    %cst_23 = arith.constant 0.000000e+00 : f32
    %54 = vector.broadcast %cst_23 : f32 to vector<8x128xf32>
    %55 = arith.maximumf %53, %54 : vector<8x128xf32>
    %56 = arith.truncf %55 : vector<8x128xf32> to vector<8x128xbf16>
    %c0_24 = arith.constant 0 : index
    %c0_25 = arith.constant 0 : index
    %57 = vector.load %arg4[%c0_24, %c0_25] : memref<128x128xbf16, #tpu.memory_space<vmem>>, vector<128x128xbf16>
    %cst_26 = arith.constant dense<0.000000e+00> : vector<8x128xf32>
    %58 = tpu.matmul %56, %57, %cst_26 {dimension_numbers = #tpu.dot_dimension_numbers<[1], [0], [0], [1], [0, 0, 1, 1], [], []>} : vector<8x128xbf16>, vector<128x128xbf16>, vector<8x128xf32> -> vector<8x128xf32>
    %c0_27 = arith.constant 0 : index
    %c0_28 = arith.constant 0 : index
    %59 = vector.load %arg5[%c0_27, %c0_28] : memref<1x128xf32, #tpu.memory_space<vmem>>, vector<1x128xf32>
    %60 = vector.broadcast %59 : vector<1x128xf32> to vector<8x128xf32>
    %61 = arith.addf %58, %60 : vector<8x128xf32>
    %c0_29 = arith.constant 0 : index
    %c0_30 = arith.constant 0 : index
    %62 = vector.load %arg6[%c0_29, %c0_30] : memref<8x128xf32, #tpu.memory_space<vmem>>, vector<8x128xf32>
    tpu.vector_store %arg6[%c0_29, %c0_30], %61 {strides = array<i32>} : memref<8x128xf32, #tpu.memory_space<vmem>>, vector<8x128xf32>,
    return
  }
}

</mosaic_0001>

<llo_original>
// kernel: tpu_custom_call.1
$region0: #{tpu_custom_call.1}
  #allocation0 [shape = 'u32[]', space=smem, size = 0x4, offset = 0x4, fixed_abs, tag = 'smem constant byte address 0x4 - core index']
  #allocation1 [shape = 'u32[144,128]{1,0:T(1,128)}', space=vmem, size = 0x12000, scoped, tag = 'internal scratch']
  %s0 = inlined_call_operand.hbm [shape: bf16[64,128], index: 0, kind: input, shape index: {}]
  %s1 = inlined_call_operand.hbm [shape: bf16[128,128], index: 1, kind: input, shape index: {}]
  %s2 = inlined_call_operand.vmem [shape: f32[1,128], index: 2, kind: input, shape index: {}]
  %s3 = inlined_call_operand.hbm [shape: bf16[128,128], index: 3, kind: input, shape index: {}]
  %s4 = inlined_call_operand.hbm [shape: bf16[128,128], index: 4, kind: input, shape index: {}]
  %s5 = inlined_call_operand.vmem [shape: f32[1,128], index: 5, kind: input, shape index: {}]
  %s6 = inlined_call_operand.hbm [shape: f32[8,128], index: 6, kind: output, shape index: {}]
  %s7 = sld [smem:[#allocation0]]
  $region50: #{tpu_custom_call.1} parent=0
    _
  %s9 = ssub.s32 1, %s7
  %s10 = scalar_select 0, %s9, %s7
  $region1: #{tpu_custom_call.1} parent=0
    #allocation2 [shape = 'u8[16384]{0}', space=vmem, size = 0x4000, scoped, tag = 'input window, operand 0, single buffered']
    #allocation3 [shape = 's32[1]{0}', space=sflag, size = 0x4, scoped, tag = 'scoped memory for tpu_custom_call.1']
    #allocation4 [shape = 's32[1]{0}', space=sflag, size = 0x4, scoped, tag = 'scoped memory for tpu_custom_call.1']
    #allocation5 [shape = 'u8[32768]{0}', space=vmem, size = 0x8000, scoped, tag = 'input window, operand 1, single buffered']
    #allocation6 [shape = 's32[1]{0}', space=sflag, size = 0x4, scoped, tag = 'scoped memory for tpu_custom_call.1']
    #allocation7 [shape = 'u8[32768]{0}', space=vmem, size = 0x8000, scoped, tag = 'input window, operand 3, single buffered']
    #allocation8 [shape = 'u8[32768]{0}', space=vmem, size = 0x8000, scoped, tag = 'input window, operand 4, single buffered']
    #allocation9 [shape = 's32[1]{0}', space=sflag, size = 0x4, scoped, tag = 'scoped memory for tpu_custom_call.1']
    #allocation10 [shape = 'u8[4096]{0}', space=vmem, size = 0x1000, scoped, tag = 'output window, operand 0, single buffered']
    %11 = vsyncpa [#allocation3], 0
    %12 = vsyncpa [#allocation6], 0
    %13 = vsyncpa [#allocation9], 0
    %14 = vsyncpa [#allocation4], 0
    // Predicated region
    $region2: #{tpu_custom_call.1} parent=1 // pred_check
      _
    $region3: #{tpu_custom_call.1} parent=1 // pred_check_branch
      %16 = sbr.rel (0) target = $region5
    $region4: #{tpu_custom_call.1} parent=1 // pred_region
      %s18 = ssub.s32 512, 512
      %19 = vsyncadd [#allocation3], %s18
      %s20 = sshll.u32 [#allocation2], 4
      %s21 = int_to_ptr.vmem [resolvable:$true] %s20
      %26 = dma.hbm_to_vmem [thread:$0]  %s0, 512, %s21, [#allocation3], 64, 64, 4
    $region5: #{tpu_custom_call.1} parent=1 // pred_fallthru
      _
    // Predicated region
    $region6: #{tpu_custom_call.1} parent=1 // pred_check
      _
    $region7: #{tpu_custom_call.1} parent=1 // pred_check_branch
      %28 = sbr.rel (0) target = $region9
    $region8: #{tpu_custom_call.1} parent=1 // pred_region
      %s30 = ssub.s32 1024, 1024
      %31 = vsyncadd [#allocation6], %s30
      %s32 = sshll.u32 [#allocation5], 4
      %s33 = int_to_ptr.vmem [resolvable:$true] %s32
      %38 = dma.hbm_to_vmem [thread:$0]  %s1, 1024, %s33, [#allocation6], 64, 64, 4
    $region9: #{tpu_custom_call.1} parent=1 // pred_fallthru
      _
    // Predicated region
    $region10: #{tpu_custom_call.1} parent=1 // pred_check
      _
    $region11: #{tpu_custom_call.1} parent=1 // pred_check_branch
      %40 = sbr.rel (0) target = $region13
    $region12: #{tpu_custom_call.1} parent=1 // pred_region
      _
    $region13: #{tpu_custom_call.1} parent=1 // pred_fallthru
      _
    // Predicated region
    $region14: #{tpu_custom_call.1} parent=1 // pred_check
      _
    $region15: #{tpu_custom_call.1} parent=1 // pred_check_branch
      %42 = sbr.rel (0) target = $region17
    $region16: #{tpu_custom_call.1} parent=1 // pred_region
      %s44 = ssub.s32 1024, 1024
      %45 = vsyncadd [#allocation6], %s44
      %s46 = sshll.u32 [#allocation7], 4
      %s47 = int_to_ptr.vmem [resolvable:$true] %s46
      %52 = dma.hbm_to_vmem [thread:$0]  %s3, 1024, %s47, [#allocation6], 64, 64, 4
    $region17: #{tpu_custom_call.1} parent=1 // pred_fallthru
      _
    // Predicated region
    $region18: #{tpu_custom_call.1} parent=1 // pred_check
      _
    $region19: #{tpu_custom_call.1} parent=1 // pred_check_branch
      %54 = sbr.rel (0) target = $region21
    $region20: #{tpu_custom_call.1} parent=1 // pred_region
      %s56 = ssub.s32 1024, 1024
      %57 = vsyncadd [#allocation9], %s56
      %s58 = sshll.u32 [#allocation8], 4
      %s59 = int_to_ptr.vmem [resolvable:$true] %s58
      %64 = dma.hbm_to_vmem [thread:$0]  %s4, 1024, %s59, [#allocation9], 64, 64, 4
    $region21: #{tpu_custom_call.1} parent=1 // pred_fallthru
      _
    // Predicated region
    $region22: #{tpu_custom_call.1} parent=1 // pred_check
      _
    $region23: #{tpu_custom_call.1} parent=1 // pred_check_branch
      %66 = sbr.rel (0) target = $region25
    $region24: #{tpu_custom_call.1} parent=1 // pred_region
      _
    $region25: #{tpu_custom_call.1} parent=1 // pred_fallthru
      _
    // Predicated region
    $region26: #{tpu_custom_call.1} parent=1 // pred_check
      _
    $region27: #{tpu_custom_call.1} parent=1 // pred_check_branch
      %68 = sbr.rel (0) target = $region29
    $region28: #{tpu_custom_call.1} parent=1 // pred_region
      %69 = dma.done [#allocation3], 512
    $region29: #{tpu_custom_call.1} parent=1 // pred_fallthru
      _
    // Predicated region
    $region30: #{tpu_custom_call.1} parent=1 // pred_check
      _
    $region31: #{tpu_custom_call.1} parent=1 // pred_check_branch
      %71 = sbr.rel (0) target = $region33
    $region32: #{tpu_custom_call.1} parent=1 // pred_region
      %72 = dma.done [#allocation6], 1024
    $region33: #{tpu_custom_call.1} parent=1 // pred_fallthru
      _
    // Predicated region
    $region34: #{tpu_custom_call.1} parent=1 // pred_check
      _
    $region35: #{tpu_custom_call.1} parent=1 // pred_check_branch
      %74 = sbr.rel (0) target = $region37
    $region36: #{tpu_custom_call.1} parent=1 // pred_region
      %75 = dma.done [#allocation6], 1024
    $region37: #{tpu_custom_call.1} parent=1 // pred_fallthru
      _
    // Predicated region
    $region38: #{tpu_custom_call.1} parent=1 // pred_check
      _
    $region39: #{tpu_custom_call.1} parent=1 // pred_check_branch
      %77 = sbr.rel (0) target = $region41
    $region40: #{tpu_custom_call.1} parent=1 // pred_region
      %78 = dma.done [#allocation9], 1024
    $region41: #{tpu_custom_call.1} parent=1 // pred_fallthru
      _
    %v80 = vld [vmem:[#allocation2] sm:$0xf]
    %v81 = vld [vmem:[#allocation2 + $0x4] sm:$0xf]
    %v82 = vld [vmem:[#allocation2 + $0x8] sm:$0xf]
    %v83 = vld [vmem:[#allocation2 + $0xc] sm:$0xf]
    %v84 = vld [vmem:[#allocation2 + $0x10] sm:$0xf]
    %v85 = vld [vmem:[#allocation2 + $0x14] sm:$0xf]
    %v86 = vld [vmem:[#allocation2 + $0x18] sm:$0xf]
    %v87 = vld [vmem:[#allocation2 + $0x1c] sm:$0xf]
    %v88 = vld [vmem:[#allocation5] sm:$0xf]
    %v89 = vld [vmem:[#allocation5 + $0x4] sm:$0xf]
    %v90 = vld [vmem:[#allocation5 + $0x8] sm:$0xf]
    %v91 = vld [vmem:[#allocation5 + $0xc] sm:$0xf]
    %v92 = vld [vmem:[#allocation5 + $0x10] sm:$0xf]
    %v93 = vld [vmem:[#allocation5 + $0x14] sm:$0xf]
    %v94 = vld [vmem:[#allocation5 + $0x18] sm:$0xf]
    %v95 = vld [vmem:[#allocation5 + $0x1c] sm:$0xf]
    %v96 = vld [vmem:[#allocation5 + $0x20] sm:$0xf]
    %v97 = vld [vmem:[#allocation5 + $0x24] sm:$0xf]
    %v98 = vld [vmem:[#allocation5 + $0x28] sm:$0xf]
    %v99 = vld [vmem:[#allocation5 + $0x2c] sm:$0xf]
    %v100 = vld [vmem:[#allocation5 + $0x30] sm:$0xf]
    %v101 = vld [vmem:[#allocation5 + $0x34] sm:$0xf]
    %v102 = vld [vmem:[#allocation5 + $0x38] sm:$0xf]
    %v103 = vld [vmem:[#allocation5 + $0x3c] sm:$0xf]
    %v104 = vld [vmem:[%s2] sm:$0x1]
    %v106 = vlaneseq
    %v107 = vshrl.u32 %v106, 7
    %v108 = vsub.s32 0, %v107
    %v109 = vrot.slane %v104, %v108
    %v119 = vunpack.c.l.b16 %v80
    %v120 = vunpack.c.l.b16 %v81
    %v121 = vunpack.c.l.b16 %v82
    %v122 = vunpack.c.l.b16 %v83
    %v123 = vunpack.c.l.b16 %v84
    %v124 = vunpack.c.l.b16 %v85
    %v125 = vunpack.c.l.b16 %v86
    %v126 = vunpack.c.l.b16 %v87
    %v127 = vpack.c.b16 %v120, %v119
    %v128 = vpack.c.b16 %v122, %v121
    %v129 = vpack.c.b16 %v124, %v123
    %v130 = vpack.c.b16 %v126, %v125
    %v151 = vunpack.c.l.b16 %v88
    %v152 = vunpack.c.l.b16 %v89
    %v153 = vunpack.c.l.b16 %v90
    %v154 = vunpack.c.l.b16 %v91
    %v155 = vunpack.c.l.b16 %v92
    %v156 = vunpack.c.l.b16 %v93
    %v157 = vunpack.c.l.b16 %v94
    %v158 = vunpack.c.l.b16 %v95
    %v159 = vunpack.c.l.b16 %v96
    %v160 = vunpack.c.l.b16 %v97
    %v161 = vunpack.c.l.b16 %v98
    %v162 = vunpack.c.l.b16 %v99
    %v163 = vunpack.c.l.b16 %v100
    %v164 = vunpack.c.l.b16 %v101
    %v165 = vunpack.c.l.b16 %v102
    %v166 = vunpack.c.l.b16 %v103
    %v167 = vpack.c.b16 %v152, %v151
    %v168 = vpack.c.b16 %v154, %v153
    %v169 = vpack.c.b16 %v156, %v155
    %v170 = vpack.c.b16 %v158, %v157
    %v171 = vpack.c.b16 %v160, %v159
    %v172 = vpack.c.b16 %v162, %v161
    %v173 = vpack.c.b16 %v164, %v163
    %v174 = vpack.c.b16 %v166, %v165
    %183 = vmatprep.subr.bf16.mxu0 0
    %184 = vmatpush1.bf16.msra.mxu0 %v167
    %185 = vmatprep.subr.bf16.mxu0 0
    %186 = vmatpush1.bf16.msra.mxu0 %v168
    %187 = vmatprep.subr.bf16.mxu0 0
    %188 = vmatpush1.bf16.msra.mxu0 %v169
    %189 = vmatprep.subr.bf16.mxu0 0
    %190 = vmatpush1.bf16.msra.mxu0 %v170
    %191 = vmatprep.subr.bf16.mxu0 0
    %192 = vmatpush1.bf16.msra.mxu0 %v171
    %193 = vmatprep.subr.bf16.mxu0 0
    %194 = vmatpush1.bf16.msra.mxu0 %v172
    %195 = vmatprep.subr.bf16.mxu0 0
    %196 = vmatpush1.bf16.msra.mxu0 %v173
    %197 = vmatprep.subr.bf16.mxu0 0
    %198 = vmatpush1.bf16.msra.mxu0 %v174
    %199 = vmatprep.subr.bf16.mxu0 0
    %200 = vmatpush1.bf16.msra.mxu0 0
    %201 = vmatprep.subr.bf16.mxu0 0
    %202 = vmatpush1.bf16.msra.mxu0 0
    %203 = vmatprep.subr.bf16.mxu0 0
    %204 = vmatpush1.bf16.msra.mxu0 0
    %205 = vmatprep.subr.bf16.mxu0 0
    %206 = vmatpush1.bf16.msra.mxu0 0
    %207 = vmatprep.subr.bf16.mxu0 0
    %208 = vmatpush1.bf16.msra.mxu0 0
    %209 = vmatprep.subr.bf16.mxu0 0
    %210 = vmatpush1.bf16.msra.mxu0 0
    %211 = vmatprep.subr.bf16.mxu0 0
    %212 = vmatpush1.bf16.msra.mxu0 0
    %213 = vmatprep.subr.bf16.mxu0 0
    %214 = vmatpush1.bf16.msra.mxu0 0
    %215 = vmatprep.mubr.bf16.mxu0 0
    %216 = vmatmul.mubr.bf16.gmra.mrb[0].mxu0 %v127
    %v217 = vpop.f32.mrb[0].mxu0
    %v218 = vadd.f32 %v109, %v217
    %v219 = vpop.f32.mrb[0].mxu0
    %v220 = vpop.f32.mrb[0].mxu0
    %v221 = vadd.f32 %v109, %v220
    %v222 = vpop.f32.mrb[0].mxu0
    %223 = vmatprep.mubr.bf16.mxu0 0
    %224 = vmatmul.mubr.bf16.gmra.mrb[0].mxu0 %v128
    %v225 = vpop.f32.mrb[0].mxu0
    %v226 = vadd.f32 %v109, %v225
    %v227 = vpop.f32.mrb[0].mxu0
    %v228 = vpop.f32.mrb[0].mxu0
    %v229 = vadd.f32 %v109, %v228
    %v230 = vpop.f32.mrb[0].mxu0
    %231 = vmatprep.mubr.bf16.mxu0 0
    %232 = vmatmul.mubr.bf16.gmra.mrb[0].mxu0 %v129
    %v233 = vpop.f32.mrb[0].mxu0
    %v234 = vadd.f32 %v109, %v233
    %v235 = vpop.f32.mrb[0].mxu0
    %v236 = vpop.f32.mrb[0].mxu0
    %v237 = vadd.f32 %v109, %v236
    %v238 = vpop.f32.mrb[0].mxu0
    %239 = vmatprep.mubr.bf16.mxu0 0
    %240 = vmatmul.mubr.bf16.gmra.mrb[0].mxu0 %v130
    %v241 = vpop.f32.mrb[0].mxu0
    %v242 = vadd.f32 %v109, %v241
    %v243 = vpop.f32.mrb[0].mxu0
    %v244 = vpop.f32.mrb[0].mxu0
    %v245 = vadd.f32 %v109, %v244
    %v246 = vpop.f32.mrb[0].mxu0
    %247 = vdwg.mxu0
    %v248 = vld [vmem:[#allocation7] sm:$0xf]
    %v249 = vld [vmem:[#allocation7 + $0x4] sm:$0xf]
    %v250 = vld [vmem:[#allocation7 + $0x8] sm:$0xf]
    %v251 = vld [vmem:[#allocation7 + $0xc] sm:$0xf]
    %v252 = vld [vmem:[#allocation7 + $0x10] sm:$0xf]
    %v253 = vld [vmem:[#allocation7 + $0x14] sm:$0xf]
    %v254 = vld [vmem:[#allocation7 + $0x18] sm:$0xf]
    %v255 = vld [vmem:[#allocation7 + $0x1c] sm:$0xf]
    %v256 = vld [vmem:[#allocation7 + $0x20] sm:$0xf]
    %v257 = vld [vmem:[#allocation7 + $0x24] sm:$0xf]
    %v258 = vld [vmem:[#allocation7 + $0x28] sm:$0xf]
    %v259 = vld [vmem:[#allocation7 + $0x2c] sm:$0xf]
    %v260 = vld [vmem:[#allocation7 + $0x30] sm:$0xf]
    %v261 = vld [vmem:[#allocation7 + $0x34] sm:$0xf]
    %v262 = vld [vmem:[#allocation7 + $0x38] sm:$0xf]
    %v263 = vld [vmem:[#allocation7 + $0x3c] sm:$0xf]
    %v280 = vunpack.c.l.b16 %v248
    %v281 = vunpack.c.l.b16 %v249
    %v282 = vunpack.c.l.b16 %v250
    %v283 = vunpack.c.l.b16 %v251
    %v284 = vunpack.c.l.b16 %v252
    %v285 = vunpack.c.l.b16 %v253
    %v286 = vunpack.c.l.b16 %v254
    %v287 = vunpack.c.l.b16 %v255
    %v288 = vunpack.c.l.b16 %v256
    %v289 = vunpack.c.l.b16 %v257
    %v290 = vunpack.c.l.b16 %v258
    %v291 = vunpack.c.l.b16 %v259
    %v292 = vunpack.c.l.b16 %v260
    %v293 = vunpack.c.l.b16 %v261
    %v294 = vunpack.c.l.b16 %v262
    %v295 = vunpack.c.l.b16 %v263
    %v296 = vpack.c.b16 %v281, %v280
    %v297 = vpack.c.b16 %v283, %v282
    %v298 = vpack.c.b16 %v285, %v284
    %v299 = vpack.c.b16 %v287, %v286
    %v300 = vpack.c.b16 %v289, %v288
    %v301 = vpack.c.b16 %v291, %v290
    %v302 = vpack.c.b16 %v293, %v292
    %v303 = vpack.c.b16 %v295, %v294
    %312 = vmatprep.subr.bf16.mxu0 0
    %313 = vmatpush1.bf16.msra.mxu0 %v296
    %314 = vmatprep.subr.bf16.mxu0 0
    %315 = vmatpush1.bf16.msra.mxu0 %v297
    %316 = vmatprep.subr.bf16.mxu0 0
    %317 = vmatpush1.bf16.msra.mxu0 %v298
    %318 = vmatprep.subr.bf16.mxu0 0
    %319 = vmatpush1.bf16.msra.mxu0 %v299
    %320 = vmatprep.subr.bf16.mxu0 0
    %321 = vmatpush1.bf16.msra.mxu0 %v300
    %322 = vmatprep.subr.bf16.mxu0 0
    %323 = vmatpush1.bf16.msra.mxu0 %v301
    %324 = vmatprep.subr.bf16.mxu0 0
    %325 = vmatpush1.bf16.msra.mxu0 %v302
    %326 = vmatprep.subr.bf16.mxu0 0
    %327 = vmatpush1.bf16.msra.mxu0 %v303
    %328 = vmatprep.subr.bf16.mxu0 0
    %329 = vmatpush1.bf16.msra.mxu0 0
    %330 = vmatprep.subr.bf16.mxu0 0
    %331 = vmatpush1.bf16.msra.mxu0 0
    %332 = vmatprep.subr.bf16.mxu0 0
    %333 = vmatpush1.bf16.msra.mxu0 0
    %334 = vmatprep.subr.bf16.mxu0 0
    %335 = vmatpush1.bf16.msra.mxu0 0
    %336 = vmatprep.subr.bf16.mxu0 0
    %337 = vmatpush1.bf16.msra.mxu0 0
    %338 = vmatprep.subr.bf16.mxu0 0
    %339 = vmatpush1.bf16.msra.mxu0 0
    %340 = vmatprep.subr.bf16.mxu0 0
    %341 = vmatpush1.bf16.msra.mxu0 0
    %342 = vmatprep.subr.bf16.mxu0 0
    %343 = vmatpush1.bf16.msra.mxu0 0
    %344 = vmatprep.mubr.bf16.mxu0 0
    %345 = vmatmul.mubr.bf16.gmra.mrb[0].mxu0 0
    %v346 = vpop.f32.mrb[0].mxu0
    %v347 = vadd.f32 0.0, %v346
    %v348 = vpop.f32.mrb[0].mxu0
    %v349 = vpop.f32.mrb[0].mxu0
    %v350 = vpop.f32.mrb[0].mxu0
    %351 = vdwg.mxu0
    %v352 = vadd.f32 %v218, %v347
    %v353 = vmax.f32 %v352, 0.0
    %v354 = vpack.c.bf16 %v353, %v353
    %355 = vmatprep.subr.bf16.mxu0 0
    %356 = vmatpush1.bf16.msra.mxu0 %v296
    %357 = vmatprep.subr.bf16.mxu0 0
    %358 = vmatpush1.bf16.msra.mxu0 %v297
    %359 = vmatprep.subr.bf16.mxu0 0
    %360 = vmatpush1.bf16.msra.mxu0 %v298
    %361 = vmatprep.subr.bf16.mxu0 0
    %362 = vmatpush1.bf16.msra.mxu0 %v299
    %363 = vmatprep.subr.bf16.mxu0 0
    %364 = vmatpush1.bf16.msra.mxu0 %v300
    %365 = vmatprep.subr.bf16.mxu0 0
    %366 = vmatpush1.bf16.msra.mxu0 %v301
    %367 = vmatprep.subr.bf16.mxu0 0
    %368 = vmatpush1.bf16.msra.mxu0 %v302
    %369 = vmatprep.subr.bf16.mxu0 0
    %370 = vmatpush1.bf16.msra.mxu0 %v303
    %371 = vmatprep.subr.bf16.mxu0 0
    %372 = vmatpush1.bf16.msra.mxu0 0
    %373 = vmatprep.subr.bf16.mxu0 0
    %374 = vmatpush1.bf16.msra.mxu0 0
    %375 = vmatprep.subr.bf16.mxu0 0
    %376 = vmatpush1.bf16.msra.mxu0 0
    %377 = vmatprep.subr.bf16.mxu0 0
    %378 = vmatpush1.bf16.msra.mxu0 0
    %379 = vmatprep.subr.bf16.mxu0 0
    %380 = vmatpush1.bf16.msra.mxu0 0
    %381 = vmatprep.subr.bf16.mxu0 0
    %382 = vmatpush1.bf16.msra.mxu0 0
    %383 = vmatprep.subr.bf16.mxu0 0
    %384 = vmatpush1.bf16.msra.mxu0 0
    %385 = vmatprep.subr.bf16.mxu0 0
    %386 = vmatpush1.bf16.msra.mxu0 0
    %387 = vmatprep.mubr.bf16.mxu0 0
    %388 = vmatmul.mubr.bf16.gmra.mrb[0].mxu0 %v354
    %v389 = vpop.f32.mrb[0].mxu0
    %v390 = vadd.f32 0.0, %v389
    %v391 = vpop.f32.mrb[0].mxu0
    %v392 = vpop.f32.mrb[0].mxu0
    %v393 = vpop.f32.mrb[0].mxu0
    %394 = vdwg.mxu0
    %v395 = vadd.f32 %v221, %v390
    %v396 = vmax.f32 %v395, 0.0
    %v397 = vpack.c.bf16 %v396, %v396
    %398 = vmatprep.subr.bf16.mxu0 0
    %399 = vmatpush1.bf16.msra.mxu0 %v296
    %400 = vmatprep.subr.bf16.mxu0 0
    %401 = vmatpush1.bf16.msra.mxu0 %v297
    %402 = vmatprep.subr.bf16.mxu0 0
    %403 = vmatpush1.bf16.msra.mxu0 %v298
    %404 = vmatprep.subr.bf16.mxu0 0
    %405 = vmatpush1.bf16.msra.mxu0 %v299
    %406 = vmatprep.subr.bf16.mxu0 0
    %407 = vmatpush1.bf16.msra.mxu0 %v300
    %408 = vmatprep.subr.bf16.mxu0 0
    %409 = vmatpush1.bf16.msra.mxu0 %v301
    %410 = vmatprep.subr.bf16.mxu0 0
    %411 = vmatpush1.bf16.msra.mxu0 %v302
    %412 = vmatprep.subr.bf16.mxu0 0
    %413 = vmatpush1.bf16.msra.mxu0 %v303
    %414 = vmatprep.subr.bf16.mxu0 0
    %415 = vmatpush1.bf16.msra.mxu0 0
    %416 = vmatprep.subr.bf16.mxu0 0
    %417 = vmatpush1.bf16.msra.mxu0 0
    %418 = vmatprep.subr.bf16.mxu0 0
    %419 = vmatpush1.bf16.msra.mxu0 0
    %420 = vmatprep.subr.bf16.mxu0 0
    %421 = vmatpush1.bf16.msra.mxu0 0
    %422 = vmatprep.subr.bf16.mxu0 0
    %423 = vmatpush1.bf16.msra.mxu0 0
    %424 = vmatprep.subr.bf16.mxu0 0
    %425 = vmatpush1.bf16.msra.mxu0 0
    %426 = vmatprep.subr.bf16.mxu0 0
    %427 = vmatpush1.bf16.msra.mxu0 0
    %428 = vmatprep.subr.bf16.mxu0 0
    %429 = vmatpush1.bf16.msra.mxu0 0
    %430 = vmatprep.mubr.bf16.mxu0 0
    %431 = vmatmul.mubr.bf16.gmra.mrb[0].mxu0 %v397
    %v432 = vpop.f32.mrb[0].mxu0
    %v433 = vadd.f32 0.0, %v432
    %v434 = vpop.f32.mrb[0].mxu0
    %v435 = vpop.f32.mrb[0].mxu0
    %v436 = vpop.f32.mrb[0].mxu0
    %437 = vdwg.mxu0
    %v438 = vadd.f32 %v226, %v433
    %v439 = vmax.f32 %v438, 0.0
    %v440 = vpack.c.bf16 %v439, %v439
    %441 = vmatprep.subr.bf16.mxu0 0
    %442 = vmatpush1.bf16.msra.mxu0 %v296
    %443 = vmatprep.subr.bf16.mxu0 0
    %444 = vmatpush1.bf16.msra.mxu0 %v297
    %445 = vmatprep.subr.bf16.mxu0 0
    %446 = vmatpush1.bf16.msra.mxu0 %v298
    %447 = vmatprep.subr.bf16.mxu0 0
    %448 = vmatpush1.bf16.msra.mxu0 %v299
    %449 = vmatprep.subr.bf16.mxu0 0
    %450 = vmatpush1.bf16.msra.mxu0 %v300
    %451 = vmatprep.subr.bf16.mxu0 0
    %452 = vmatpush1.bf16.msra.mxu0 %v301
    %453 = vmatprep.subr.bf16.mxu0 0
    %454 = vmatpush1.bf16.msra.mxu0 %v302
    %455 = vmatprep.subr.bf16.mxu0 0
    %456 = vmatpush1.bf16.msra.mxu0 %v303
    %457 = vmatprep.subr.bf16.mxu0 0
    %458 = vmatpush1.bf16.msra.mxu0 0
    %459 = vmatprep.subr.bf16.mxu0 0
    %460 = vmatpush1.bf16.msra.mxu0 0
    %461 = vmatprep.subr.bf16.mxu0 0
    %462 = vmatpush1.bf16.msra.mxu0 0
    %463 = vmatprep.subr.bf16.mxu0 0
    %464 = vmatpush1.bf16.msra.mxu0 0
    %465 = vmatprep.subr.bf16.mxu0 0
    %466 = vmatpush1.bf16.msra.mxu0 0
    %467 = vmatprep.subr.bf16.mxu0 0
    %468 = vmatpush1.bf16.msra.mxu0 0
    %469 = vmatprep.subr.bf16.mxu0 0
    %470 = vmatpush1.bf16.msra.mxu0 0
    %471 = vmatprep.subr.bf16.mxu0 0
    %472 = vmatpush1.bf16.msra.mxu0 0
    %473 = vmatprep.mubr.bf16.mxu0 0
    %474 = vmatmul.mubr.bf16.gmra.mrb[0].mxu0 %v440
    %v475 = vpop.f32.mrb[0].mxu0
    %v476 = vadd.f32 0.0, %v475
    %v477 = vpop.f32.mrb[0].mxu0
    %v478 = vpop.f32.mrb[0].mxu0
    %v479 = vpop.f32.mrb[0].mxu0
    %480 = vdwg.mxu0
    %v481 = vadd.f32 %v229, %v476
    %v482 = vmax.f32 %v481, 0.0
    %v483 = vpack.c.bf16 %v482, %v482
    %484 = vmatprep.subr.bf16.mxu0 0
    %485 = vmatpush1.bf16.msra.mxu0 %v296
    %486 = vmatprep.subr.bf16.mxu0 0
    %487 = vmatpush1.bf16.msra.mxu0 %v297
    %488 = vmatprep.subr.bf16.mxu0 0
    %489 = vmatpush1.bf16.msra.mxu0 %v298
    %490 = vmatprep.subr.bf16.mxu0 0
    %491 = vmatpush1.bf16.msra.mxu0 %v299
    %492 = vmatprep.subr.bf16.mxu0 0
    %493 = vmatpush1.bf16.msra.mxu0 %v300
    %494 = vmatprep.subr.bf16.mxu0 0
    %495 = vmatpush1.bf16.msra.mxu0 %v301
    %496 = vmatprep.subr.bf16.mxu0 0
    %497 = vmatpush1.bf16.msra.mxu0 %v302
    %498 = vmatprep.subr.bf16.mxu0 0
    %499 = vmatpush1.bf16.msra.mxu0 %v303
    %500 = vmatprep.subr.bf16.mxu0 0
    %501 = vmatpush1.bf16.msra.mxu0 0
    %502 = vmatprep.subr.bf16.mxu0 0
    %503 = vmatpush1.bf16.msra.mxu0 0
    %504 = vmatprep.subr.bf16.mxu0 0
    %505 = vmatpush1.bf16.msra.mxu0 0
    %506 = vmatprep.subr.bf16.mxu0 0
    %507 = vmatpush1.bf16.msra.mxu0 0
    %508 = vmatprep.subr.bf16.mxu0 0
    %509 = vmatpush1.bf16.msra.mxu0 0
    %510 = vmatprep.subr.bf16.mxu0 0
    %511 = vmatpush1.bf16.msra.mxu0 0
    %512 = vmatprep.subr.bf16.mxu0 0
    %513 = vmatpush1.bf16.msra.mxu0 0
    %514 = vmatprep.subr.bf16.mxu0 0
    %515 = vmatpush1.bf16.msra.mxu0 0
    %516 = vmatprep.mubr.bf16.mxu0 0
    %517 = vmatmul.mubr.bf16.gmra.mrb[0].mxu0 %v483
    %v518 = vpop.f32.mrb[0].mxu0
    %v519 = vadd.f32 0.0, %v518
    %v520 = vpop.f32.mrb[0].mxu0
    %v521 = vpop.f32.mrb[0].mxu0
    %v522 = vpop.f32.mrb[0].mxu0
    %523 = vdwg.mxu0
    %v524 = vadd.f32 %v234, %v519
    %v525 = vmax.f32 %v524, 0.0
    %v526 = vpack.c.bf16 %v525, %v525
    %527 = vmatprep.subr.bf16.mxu0 0
    %528 = vmatpush1.bf16.msra.mxu0 %v296
    %529 = vmatprep.subr.bf16.mxu0 0
    %530 = vmatpush1.bf16.msra.mxu0 %v297
    %531 = vmatprep.subr.bf16.mxu0 0
    %532 = vmatpush1.bf16.msra.mxu0 %v298
    %533 = vmatprep.subr.bf16.mxu0 0
    %534 = vmatpush1.bf16.msra.mxu0 %v299
    %535 = vmatprep.subr.bf16.mxu0 0
    %536 = vmatpush1.bf16.msra.mxu0 %v300
    %537 = vmatprep.subr.bf16.mxu0 0
    %538 = vmatpush1.bf16.msra.mxu0 %v301
    %539 = vmatprep.subr.bf16.mxu0 0
    %540 = vmatpush1.bf16.msra.mxu0 %v302
    %541 = vmatprep.subr.bf16.mxu0 0
    %542 = vmatpush1.bf16.msra.mxu0 %v303
    %543 = vmatprep.subr.bf16.mxu0 0
    %544 = vmatpush1.bf16.msra.mxu0 0
    %545 = vmatprep.subr.bf16.mxu0 0
    %546 = vmatpush1.bf16.msra.mxu0 0
    %547 = vmatprep.subr.bf16.mxu0 0
    %548 = vmatpush1.bf16.msra.mxu0 0
    %549 = vmatprep.subr.bf16.mxu0 0
    %550 = vmatpush1.bf16.msra.mxu0 0
    %551 = vmatprep.subr.bf16.mxu0 0
    %552 = vmatpush1.bf16.msra.mxu0 0
    %553 = vmatprep.subr.bf16.mxu0 0
    %554 = vmatpush1.bf16.msra.mxu0 0
    %555 = vmatprep.subr.bf16.mxu0 0
    %556 = vmatpush1.bf16.msra.mxu0 0
    %557 = vmatprep.subr.bf16.mxu0 0
    %558 = vmatpush1.bf16.msra.mxu0 0
    %559 = vmatprep.mubr.bf16.mxu0 0
    %560 = vmatmul.mubr.bf16.gmra.mrb[0].mxu0 %v526
    %v561 = vpop.f32.mrb[0].mxu0
    %v562 = vadd.f32 0.0, %v561
    %v563 = vpop.f32.mrb[0].mxu0
    %v564 = vpop.f32.mrb[0].mxu0
    %v565 = vpop.f32.mrb[0].mxu0
    %566 = vdwg.mxu0
    %v567 = vadd.f32 %v237, %v562
    %v568 = vmax.f32 %v567, 0.0
    %v569 = vpack.c.bf16 %v568, %v568
    %570 = vmatprep.subr.bf16.mxu0 0
    %571 = vmatpush1.bf16.msra.mxu0 %v296
    %572 = vmatprep.subr.bf16.mxu0 0
    %573 = vmatpush1.bf16.msra.mxu0 %v297
    %574 = vmatprep.subr.bf16.mxu0 0
    %575 = vmatpush1.bf16.msra.mxu0 %v298
    %576 = vmatprep.subr.bf16.mxu0 0
    %577 = vmatpush1.bf16.msra.mxu0 %v299
    %578 = vmatprep.subr.bf16.mxu0 0
    %579 = vmatpush1.bf16.msra.mxu0 %v300
    %580 = vmatprep.subr.bf16.mxu0 0
    %581 = vmatpush1.bf16.msra.mxu0 %v301
    %582 = vmatprep.subr.bf16.mxu0 0
    %583 = vmatpush1.bf16.msra.mxu0 %v302
    %584 = vmatprep.subr.bf16.mxu0 0
    %585 = vmatpush1.bf16.msra.mxu0 %v303
    %586 = vmatprep.subr.bf16.mxu0 0
    %587 = vmatpush1.bf16.msra.mxu0 0
    %588 = vmatprep.subr.bf16.mxu0 0
    %589 = vmatpush1.bf16.msra.mxu0 0
    %590 = vmatprep.subr.bf16.mxu0 0
    %591 = vmatpush1.bf16.msra.mxu0 0
    %592 = vmatprep.subr.bf16.mxu0 0
    %593 = vmatpush1.bf16.msra.mxu0 0
    %594 = vmatprep.subr.bf16.mxu0 0
    %595 = vmatpush1.bf16.msra.mxu0 0
    %596 = vmatprep.subr.bf16.mxu0 0
    %597 = vmatpush1.bf16.msra.mxu0 0
    %598 = vmatprep.subr.bf16.mxu0 0
    %599 = vmatpush1.bf16.msra.mxu0 0
    %600 = vmatprep.subr.bf16.mxu0 0
    %601 = vmatpush1.bf16.msra.mxu0 0
    %602 = vmatprep.mubr.bf16.mxu0 0
    %603 = vmatmul.mubr.bf16.gmra.mrb[0].mxu0 %v569
    %v604 = vpop.f32.mrb[0].mxu0
    %v605 = vadd.f32 0.0, %v604
    %v606 = vpop.f32.mrb[0].mxu0
    %v607 = vpop.f32.mrb[0].mxu0
    %v608 = vpop.f32.mrb[0].mxu0
    %609 = vdwg.mxu0
    %v610 = vadd.f32 %v242, %v605
    %v611 = vmax.f32 %v610, 0.0
    %v612 = vpack.c.bf16 %v611, %v611
    %613 = vmatprep.subr.bf16.mxu0 0
    %614 = vmatpush1.bf16.msra.mxu0 %v296
    %615 = vmatprep.subr.bf16.mxu0 0
    %616 = vmatpush1.bf16.msra.mxu0 %v297
    %617 = vmatprep.subr.bf16.mxu0 0
    %618 = vmatpush1.bf16.msra.mxu0 %v298
    %619 = vmatprep.subr.bf16.mxu0 0
    %620 = vmatpush1.bf16.msra.mxu0 %v299
    %621 = vmatprep.subr.bf16.mxu0 0
    %622 = vmatpush1.bf16.msra.mxu0 %v300
    %623 = vmatprep.subr.bf16.mxu0 0
    %624 = vmatpush1.bf16.msra.mxu0 %v301
    %625 = vmatprep.subr.bf16.mxu0 0
    %626 = vmatpush1.bf16.msra.mxu0 %v302
    %627 = vmatprep.subr.bf16.mxu0 0
    %628 = vmatpush1.bf16.msra.mxu0 %v303
    %629 = vmatprep.subr.bf16.mxu0 0
    %630 = vmatpush1.bf16.msra.mxu0 0
    %631 = vmatprep.subr.bf16.mxu0 0
    %632 = vmatpush1.bf16.msra.mxu0 0
    %633 = vmatprep.subr.bf16.mxu0 0
    %634 = vmatpush1.bf16.msra.mxu0 0
    %635 = vmatprep.subr.bf16.mxu0 0
    %636 = vmatpush1.bf16.msra.mxu0 0
    %637 = vmatprep.subr.bf16.mxu0 0
    %638 = vmatpush1.bf16.msra.mxu0 0
    %639 = vmatprep.subr.bf16.mxu0 0
    %640 = vmatpush1.bf16.msra.mxu0 0
    %641 = vmatprep.subr.bf16.mxu0 0
    %642 = vmatpush1.bf16.msra.mxu0 0
    %643 = vmatprep.subr.bf16.mxu0 0
    %644 = vmatpush1.bf16.msra.mxu0 0
    %645 = vmatprep.mubr.bf16.mxu0 0
    %646 = vmatmul.mubr.bf16.gmra.mrb[0].mxu0 %v612
    %v647 = vpop.f32.mrb[0].mxu0
    %v648 = vadd.f32 0.0, %v647
    %v649 = vpop.f32.mrb[0].mxu0
    %v650 = vpop.f32.mrb[0].mxu0
    %v651 = vpop.f32.mrb[0].mxu0
    %652 = vdwg.mxu0
    %v653 = vadd.f32 %v245, %v648
    %v654 = vmax.f32 %v653, 0.0
    %v655 = vpack.c.bf16 %v654, %v654
    %v656 = vld [vmem:[#allocation8] sm:$0xf]
    %v657 = vld [vmem:[#allocation8 + $0x4] sm:$0xf]
    %v658 = vld [vmem:[#allocation8 + $0x8] sm:$0xf]
    %v659 = vld [vmem:[#allocation8 + $0xc] sm:$0xf]
    %v660 = vld [vmem:[#allocation8 + $0x10] sm:$0xf]
    %v661 = vld [vmem:[#allocation8 + $0x14] sm:$0xf]
    %v662 = vld [vmem:[#allocation8 + $0x18] sm:$0xf]
    %v663 = vld [vmem:[#allocation8 + $0x1c] sm:$0xf]
    %v664 = vld [vmem:[#allocation8 + $0x20] sm:$0xf]
    %v665 = vld [vmem:[#allocation8 + $0x24] sm:$0xf]
    %v666 = vld [vmem:[#allocation8 + $0x28] sm:$0xf]
    %v667 = vld [vmem:[#allocation8 + $0x2c] sm:$0xf]
    %v668 = vld [vmem:[#allocation8 + $0x30] sm:$0xf]
    %v669 = vld [vmem:[#allocation8 + $0x34] sm:$0xf]
    %v670 = vld [vmem:[#allocation8 + $0x38] sm:$0xf]
    %v671 = vld [vmem:[#allocation8 + $0x3c] sm:$0xf]
    %v672 = vld [vmem:[%s5] sm:$0x1]
    %v674 = vlaneseq
    %v675 = vshrl.u32 %v674, 7
    %v676 = vsub.s32 0, %v675
    %v677 = vrot.slane %v672, %v676
    %v695 = vunpack.c.l.b16 %v656
    %v696 = vunpack.c.l.b16 %v657
    %v697 = vunpack.c.l.b16 %v658
    %v698 = vunpack.c.l.b16 %v659
    %v699 = vunpack.c.l.b16 %v660
    %v700 = vunpack.c.l.b16 %v661
    %v701 = vunpack.c.l.b16 %v662
    %v702 = vunpack.c.l.b16 %v663
    %v703 = vunpack.c.l.b16 %v664
    %v704 = vunpack.c.l.b16 %v665
    %v705 = vunpack.c.l.b16 %v666
    %v706 = vunpack.c.l.b16 %v667
    %v707 = vunpack.c.l.b16 %v668
    %v708 = vunpack.c.l.b16 %v669
    %v709 = vunpack.c.l.b16 %v670
    %v710 = vunpack.c.l.b16 %v671
    %v711 = vpack.c.b16 %v696, %v695
    %v712 = vpack.c.b16 %v698, %v697
    %v713 = vpack.c.b16 %v700, %v699
    %v714 = vpack.c.b16 %v702, %v701
    %v715 = vpack.c.b16 %v704, %v703
    %v716 = vpack.c.b16 %v706, %v705
    %v717 = vpack.c.b16 %v708, %v707
    %v718 = vpack.c.b16 %v710, %v709
    %727 = vmatprep.subr.bf16.mxu0 0
    %728 = vmatpush1.bf16.msra.mxu0 %v711
    %729 = vmatprep.subr.bf16.mxu0 0
    %730 = vmatpush1.bf16.msra.mxu0 %v712
    %731 = vmatprep.subr.bf16.mxu0 0
    %732 = vmatpush1.bf16.msra.mxu0 %v713
    %733 = vmatprep.subr.bf16.mxu0 0
    %734 = vmatpush1.bf16.msra.mxu0 %v714
    %735 = vmatprep.subr.bf16.mxu0 0
    %736 = vmatpush1.bf16.msra.mxu0 %v715
    %737 = vmatprep.subr.bf16.mxu0 0
    %738 = vmatpush1.bf16.msra.mxu0 %v716
    %739 = vmatprep.subr.bf16.mxu0 0
    %740 = vmatpush1.bf16.msra.mxu0 %v717
    %741 = vmatprep.subr.bf16.mxu0 0
    %742 = vmatpush1.bf16.msra.mxu0 %v718
    %743 = vmatprep.subr.bf16.mxu0 0
    %744 = vmatpush1.bf16.msra.mxu0 0
    %745 = vmatprep.subr.bf16.mxu0 0
    %746 = vmatpush1.bf16.msra.mxu0 0
    %747 = vmatprep.subr.bf16.mxu0 0
    %748 = vmatpush1.bf16.msra.mxu0 0
    %749 = vmatprep.subr.bf16.mxu0 0
    %750 = vmatpush1.bf16.msra.mxu0 0
    %751 = vmatprep.subr.bf16.mxu0 0
    %752 = vmatpush1.bf16.msra.mxu0 0
    %753 = vmatprep.subr.bf16.mxu0 0
    %754 = vmatpush1.bf16.msra.mxu0 0
    %755 = vmatprep.subr.bf16.mxu0 0
    %756 = vmatpush1.bf16.msra.mxu0 0
    %757 = vmatprep.subr.bf16.mxu0 0
    %758 = vmatpush1.bf16.msra.mxu0 0
    %759 = vmatprep.mubr.bf16.mxu0 0
    %760 = vmatmul.mubr.bf16.gmra.mrb[0].mxu0 %v655
    %v761 = vpop.f32.mrb[0].mxu0
    %v762 = vadd.f32 %v677, %v761
    %v763 = vpop.f32.mrb[0].mxu0
    %v764 = vpop.f32.mrb[0].mxu0
    %v765 = vpop.f32.mrb[0].mxu0
    %766 = vdwg.mxu0
    %767 = vst [vmem:[#allocation10] sm:$0xff] %v762
    // Predicated region
    $region42: #{tpu_custom_call.1} parent=1 // pred_check
      _
    $region43: #{tpu_custom_call.1} parent=1 // pred_check_branch
      %769 = sbr.rel (0) target = $region45
    $region44: #{tpu_custom_call.1} parent=1 // pred_region
      %s771 = ssub.s32 128, 128
      %772 = vsyncadd [#allocation4], %s771
      %s774 = sshll.u32 [#allocation10], 4
      %s775 = int_to_ptr.vmem [resolvable:$true] %s774
      %777 = dma.vmem_to_hbm [thread:$0]  %s775, 128, %s6, [#allocation4]
    $region45: #{tpu_custom_call.1} parent=1 // pred_fallthru
      _
    // Predicated region
    $region46: #{tpu_custom_call.1} parent=1 // pred_check
      _
    $region47: #{tpu_custom_call.1} parent=1 // pred_check_branch
      %779 = sbr.rel (0) target = $region49
    $region48: #{tpu_custom_call.1} parent=1 // pred_region
      %780 = dma.done [#allocation4], 128
    $region49: #{tpu_custom_call.1} parent=1 // pred_fallthru
      _
    %781 = vsyncpa [#allocation3], 1
    %782 = vsyncpa [#allocation6], 1
    %783 = vsyncpa [#allocation9], 1
    %784 = vsyncpa [#allocation4], 1

</llo_original>
